<compile_context>
chip_gen: v5e
topology: v5e:2x2
jax: 0.10.0
libtpu: 0.0.40
codegen_flags: <defaults>
</compile_context>

<pallas_src>
import functools

import jax
import jax.numpy as jnp
import numpy as np
from jax.experimental import pallas as pl
from jax.experimental.pallas import tpu as pltpu


def lstm_chunk_kernel(x_ref, lens_ref, wih_ref, whh_ref, b_ref,
                      out_ref, hf_ref, cf_ref,
                      h_sc, c_sc, *, t_blk, padding_value):
    """One grid step = one chunk of `t_blk` timesteps over the whole batch.

    x_ref   : (t_blk*N, E) time-major embedded input rows (row s*N + n = timestep s, batch n)
    lens_ref: (N, 1) int32 sequence lengths
    wih_ref : (E, 4H), whh_ref: (H, 4H), b_ref: (1, 4H)  (gate order i, f, g, o; b = b_ih + b_hh)
    out_ref : (N, t_blk*H) batch-first, lane-dense output slab for this chunk
    hf_ref, cf_ref : (N, H) final hidden / cell state (written once, on the last chunk)
    h_sc, c_sc     : (N, H) VMEM scratch carrying the recurrent state across chunks
    """
    chunk = pl.program_id(0)
    N = lens_ref.shape[0]
    H = whh_ref.shape[0]

    @pl.when(chunk == 0)
    def _():
        h_sc[...] = jnp.zeros_like(h_sc)
        c_sc[...] = jnp.zeros_like(c_sc)

    # Hoisted input projection for the whole chunk: one big MXU matmul, bias folded in once.
    gx = (jnp.dot(x_ref[...], wih_ref[...], preferred_element_type=jnp.float32)
          + b_ref[...])                                   # (t_blk*N, 4H)

    lens = lens_ref[...]                                  # (N, 1)
    whh = whh_ref[...]                                    # (H, 4H), hoisted load
    t0 = chunk * t_blk

    h = h_sc[...]
    c = c_sc[...]
    outs = []
    # Unrolled serial recurrence: only h @ W_hh remains on the critical path.
    # TODO(synk): for large t_blk, switch to lax.fori_loop over sub-chunks to bound code size.
    for s in range(t_blk):
        gates = gx[s * N:(s + 1) * N, :] + jnp.dot(
            h, whh, preferred_element_type=jnp.float32)   # (N, 4H) — exactly one vreg at H=32
        # Nonlinearities on the full (N, 4H) tile (full lane utilization), slice afterwards.
        sg = jax.nn.sigmoid(gates)
        tg = jnp.tanh(gates)
        i_g = sg[:, 0:H]
        f_g = sg[:, H:2 * H]
        g_g = tg[:, 2 * H:3 * H]
        o_g = sg[:, 3 * H:4 * H]

        c_new = f_g * c + i_g * g_g
        h_new = o_g * jnp.tanh(c_new)

        mask = lens > (t0 + s)                            # (N, 1): sequence still active?
        h = jnp.where(mask, h_new, h)
        c = jnp.where(mask, c_new, c)
        outs.append(jnp.where(mask, h_new, jnp.float32(padding_value)))

    h_sc[...] = h
    c_sc[...] = c
    # Single lane-dense store of the whole chunk's outputs (last dim = t_blk*H, multiple of 128).
    out_ref[...] = jnp.concatenate(outs, axis=-1)

    @pl.when(chunk == pl.num_programs(0) - 1)
    def _():
        hf_ref[...] = h
        cf_ref[...] = c


def encoder_rnn_forward(ingredients, ing_lens, params, padding_value, t_blk=None):
    """JAX/Pallas equivalent of EncoderRNN.forward.

    ingredients: (N, L) int32 token ids (padded)
    ing_lens   : (N,)   int32 sequence lengths
    Returns (output_padded [N,L,H], output_lens [N], h_final [1,N,H], c_final [1,N,H]).
    """
    emb_table, w_ih, w_hh, bias = params
    N, L = ingredients.shape
    E = emb_table.shape[1]
    H = w_hh.shape[0]

    if t_blk is None:
        t_blk = L
    assert L % t_blk == 0, "pad L to a multiple of t_blk before calling"
    num_chunks = L // t_blk

    # Embedding lookup (glue — gather stays in plain JAX). Transpose the cheap int32 ids BEFORE
    # the gather so the embedded activations come out time-major with no HBM transpose.
    idx_tm = ingredients.T.reshape(-1)                    # (L*N,) row s*N+n = timestep s, batch n
    x_2d = jnp.take(emb_table, idx_tm, axis=0)            # (L*N, E)
    lens2d = ing_lens.reshape(N, 1).astype(jnp.int32)

    kernel = functools.partial(lstm_chunk_kernel, t_blk=t_blk,
                               padding_value=float(padding_value))

    grid_spec = pltpu.PrefetchScalarGridSpec(
        num_scalar_prefetch=0,
        grid=(num_chunks,),
        in_specs=[
            pl.BlockSpec((t_blk * N, E), lambda c: (c, 0)),     # time-chunk of embedded input
            pl.BlockSpec((N, 1), lambda c: (0, 0)),             # lengths (resident)
            pl.BlockSpec((E, 4 * H), lambda c: (0, 0)),         # W_ih^T (resident)
            pl.BlockSpec((H, 4 * H), lambda c: (0, 0)),         # W_hh^T (resident)
            pl.BlockSpec((1, 4 * H), lambda c: (0, 0)),         # b_ih + b_hh (resident)
        ],
        out_specs=[
            pl.BlockSpec((N, t_blk * H), lambda c: (0, c)),     # lane-dense batch-first outputs
            pl.BlockSpec((N, H), lambda c: (0, 0)),             # h_final
            pl.BlockSpec((N, H), lambda c: (0, 0)),             # c_final
        ],
        scratch_shapes=[
            pltpu.VMEM((N, H), jnp.float32),                    # h carry across chunks
            pltpu.VMEM((N, H), jnp.float32),                    # c carry across chunks
        ],
    )

    out_flat, h_final, c_final = pl.pallas_call(
        kernel,
        grid_spec=grid_spec,
        out_shape=(
            jax.ShapeDtypeStruct((N, L * H), jnp.float32),
            jax.ShapeDtypeStruct((N, H), jnp.float32),
            jax.ShapeDtypeStruct((N, H), jnp.float32),
        ),
        compiler_params=pltpu.CompilerParams(
            dimension_semantics=("arbitrary",),                 # sequential recurrence over time
        ),
    )(x_2d, lens2d, w_ih, w_hh, bias)

    # (N, L*H) -> (N, L, H) is a free row-major reshape: no transpose, no extra HBM pass.
    output_padded = out_flat.reshape(N, L, H)
    output_lens = ing_lens
    return output_padded, output_lens, h_final[None], c_final[None]


def encoder_rnn_reference(ingredients, ing_lens, params, padding_value):
    """Pure-JAX reference (mirrors nn.Embedding + nn.LSTM + pack/unpack)."""
    emb_table, w_ih, w_hh, bias = params
    N, L = ingredients.shape
    H = w_hh.shape[0]
    x = jnp.take(emb_table, ingredients, axis=0)            # (N, L, E)
    h = jnp.zeros((N, H), jnp.float32)
    c = jnp.zeros((N, H), jnp.float32)
    outs = []
    for t in range(L):
        gates = x[:, t] @ w_ih + h @ w_hh + bias[0]
        i_g = jax.nn.sigmoid(gates[:, 0:H])
        f_g = jax.nn.sigmoid(gates[:, H:2 * H])
        g_g = jnp.tanh(gates[:, 2 * H:3 * H])
        o_g = jax.nn.sigmoid(gates[:, 3 * H:4 * H])
        c_new = f_g * c + i_g * g_g
        h_new = o_g * jnp.tanh(c_new)
        mask = (ing_lens > t)[:, None]
        h = jnp.where(mask, h_new, h)
        c = jnp.where(mask, c_new, c)
        outs.append(jnp.where(mask, h_new, jnp.float32(padding_value)))
    out = jnp.stack(outs, axis=1)
    return out, ing_lens, h[None], c[None]


if __name__ == "__main__":
    # Small, deterministic config.
    VOCAB = 50          # input_size (vocabulary size)
    E = 32              # embedding_size
    H = 32              # hidden_size
    N = 8               # batch
    L = 8               # longest sequence length
    PADDING_VALUE = 0.0

    key = jax.random.PRNGKey(0)
    k_emb, k_wih, k_whh, k_bih, k_bhh, k_tok = jax.random.split(key, 6)

    # Deterministic parameter init (shapes follow nn.Embedding / nn.LSTM).
    emb_table = jax.random.normal(k_emb, (VOCAB, E), jnp.float32)
    # PyTorch stores weight_ih_l0 as (4H, E); we keep the transposed (E, 4H) layout.
    w_ih = jax.random.normal(k_wih, (E, 4 * H), jnp.float32) * 0.1
    w_hh = jax.random.normal(k_whh, (H, 4 * H), jnp.float32) * 0.1
    bias = (jax.random.normal(k_bih, (1, 4 * H), jnp.float32) * 0.1
            + jax.random.normal(k_bhh, (1, 4 * H), jnp.float32) * 0.1)  # b_ih + b_hh
    params = (emb_table, w_ih, w_hh, bias)

    # Deterministic inputs: padded token ids and descending lengths.
    ingredients = jax.random.randint(k_tok, (N, L), 0, VOCAB, jnp.int32)
    ing_lens = jnp.array([8, 7, 6, 5, 4, 3, 2, 1], jnp.int32)
    # Zero-out padded token positions (as a padded batch would be).
    pos = jnp.arange(L)[None, :]
    ingredients = jnp.where(pos < ing_lens[:, None], ingredients, 0)

    out, out_lens, h_f, c_f = encoder_rnn_forward(ingredients, ing_lens, params, PADDING_VALUE)
    jax.block_until_ready((out, out_lens, h_f, c_f))

    ref_out, ref_lens, ref_h, ref_c = encoder_rnn_reference(ingredients, ing_lens, params, PADDING_VALUE)

    assert out.shape == (N, L, H) and h_f.shape == (1, N, H) and c_f.shape == (1, N, H)
    np.testing.assert_allclose(np.asarray(out), np.asarray(ref_out), rtol=1e-5, atol=1e-5)
    np.testing.assert_allclose(np.asarray(h_f), np.asarray(ref_h), rtol=1e-5, atol=1e-5)
    np.testing.assert_allclose(np.asarray(c_f), np.asarray(ref_c), rtol=1e-5, atol=1e-5)
    np.testing.assert_array_equal(np.asarray(out_lens), np.asarray(ref_lens))

    print("KERNEL_OK")
</pallas_src>

<mosaic_0001>
module attributes {stable_mosaic.version = 11 : i64} {
  func.func @lstm_chunk_kernel(%arg0: i32, %arg1: memref<64x32xf32, #tpu.memory_space<vmem>>, %arg2: memref<8x1xi32, #tpu.memory_space<vmem>>, %arg3: memref<32x128xf32, #tpu.memory_space<vmem>>, %arg4: memref<32x128xf32, #tpu.memory_space<vmem>>, %arg5: memref<1x128xf32, #tpu.memory_space<vmem>>, %arg6: memref<8x256xf32, #tpu.memory_space<vmem>>, %arg7: memref<8x32xf32, #tpu.memory_space<vmem>>, %arg8: memref<8x32xf32, #tpu.memory_space<vmem>>, %arg9: memref<8x32xf32, #tpu.memory_space<vmem>>, %arg10: memref<8x32xf32, #tpu.memory_space<vmem>>) attributes {dimension_semantics = [#tpu.dimension_semantics<arbitrary>], iteration_bounds = array<i64: 1>, scalar_prefetch = 0 : i64, scratch_operands = 2 : i64, tpu.core_type = #tpu.core_type<tc>, window_params = [{transform_indices = @transform_0, window_bounds = array<i64: 64, 32>}, {pipeline_mode = #tpu.pipeline_mode<synchronous>, transform_indices = @transform_1, window_bounds = array<i64: 8, 1>}, {pipeline_mode = #tpu.pipeline_mode<synchronous>, transform_indices = @transform_2, window_bounds = array<i64: 32, 128>}, {pipeline_mode = #tpu.pipeline_mode<synchronous>, transform_indices = @transform_3, window_bounds = array<i64: 32, 128>}, {pipeline_mode = #tpu.pipeline_mode<synchronous>, transform_indices = @transform_4, window_bounds = array<i64: 1, 128>}, {transform_indices = @transform_5, window_bounds = array<i64: 8, 256>}, {pipeline_mode = #tpu.pipeline_mode<synchronous>, transform_indices = @transform_6, window_bounds = array<i64: 8, 32>}, {pipeline_mode = #tpu.pipeline_mode<synchronous>, transform_indices = @transform_7, window_bounds = array<i64: 8, 32>}]} {
    %c0_i32 = arith.constant 0 : i32
    %0 = arith.cmpi eq, %arg0, %c0_i32 : i32
    %1 = arith.extui %0 : i1 to i32
    %c0_i32_0 = arith.constant 0 : i32
    %2 = arith.cmpi ne, %1, %c0_i32_0 : i32
    scf.if %2 {
      %cst_47 = arith.constant 0.000000e+00 : f32
      %269 = vector.broadcast %cst_47 : f32 to vector<8x32xf32>
      %c0_48 = arith.constant 0 : index
      %c0_49 = arith.constant 0 : index
      %270 = vector.load %arg9[%c0_48, %c0_49] : memref<8x32xf32, #tpu.memory_space<vmem>>, vector<8x32xf32>
      tpu.vector_store %arg9[%c0_48, %c0_49], %269 {strides = array<i32>} : memref<8x32xf32, #tpu.memory_space<vmem>>, vector<8x32xf32>,
      %cst_50 = arith.constant 0.000000e+00 : f32
      %271 = vector.broadcast %cst_50 : f32 to vector<8x32xf32>
      %c0_51 = arith.constant 0 : index
      %c0_52 = arith.constant 0 : index
      %272 = vector.load %arg10[%c0_51, %c0_52] : memref<8x32xf32, #tpu.memory_space<vmem>>, vector<8x32xf32>
      tpu.vector_store %arg10[%c0_51, %c0_52], %271 {strides = array<i32>} : memref<8x32xf32, #tpu.memory_space<vmem>>, vector<8x32xf32>,
    } else {
    }
    %c0 = arith.constant 0 : index
    %c0_1 = arith.constant 0 : index
    %3 = vector.load %arg1[%c0, %c0_1] : memref<64x32xf32, #tpu.memory_space<vmem>>, vector<64x32xf32>
    %c0_2 = arith.constant 0 : index
    %c0_3 = arith.constant 0 : index
    %4 = vector.load %arg3[%c0_2, %c0_3] : memref<32x128xf32, #tpu.memory_space<vmem>>, vector<32x128xf32>
    %cst = arith.constant dense<0.000000e+00> : vector<64x128xf32>
    %5 = tpu.matmul %3, %4, %cst {dimension_numbers = #tpu.dot_dimension_numbers<[1], [0], [0], [1], [0, 0, 1, 1], [], []>} : vector<64x32xf32>, vector<32x128xf32>, vector<64x128xf32> -> vector<64x128xf32>
    %c0_4 = arith.constant 0 : index
    %c0_5 = arith.constant 0 : index
    %6 = vector.load %arg5[%c0_4, %c0_5] : memref<1x128xf32, #tpu.memory_space<vmem>>, vector<1x128xf32>
    %7 = vector.broadcast %6 : vector<1x128xf32> to vector<64x128xf32>
    %8 = arith.addf %5, %7 : vector<64x128xf32>
    %c0_6 = arith.constant 0 : index
    %c0_7 = arith.constant 0 : index
    %9 = vector.load %arg2[%c0_6, %c0_7] : memref<8x1xi32, #tpu.memory_space<vmem>>, vector<8x1xi32>
    %c0_8 = arith.constant 0 : index
    %c0_9 = arith.constant 0 : index
    %10 = vector.load %arg4[%c0_8, %c0_9] : memref<32x128xf32, #tpu.memory_space<vmem>>, vector<32x128xf32>
    %c8_i32 = arith.constant 8 : i32
    %11 = arith.muli %arg0, %c8_i32 : i32
    %c0_10 = arith.constant 0 : index
    %c0_11 = arith.constant 0 : index
    %12 = vector.load %arg9[%c0_10, %c0_11] : memref<8x32xf32, #tpu.memory_space<vmem>>, vector<8x32xf32>
    %c0_12 = arith.constant 0 : index
    %c0_13 = arith.constant 0 : index
    %13 = vector.load %arg10[%c0_12, %c0_13] : memref<8x32xf32, #tpu.memory_space<vmem>>, vector<8x32xf32>
    %14 = vector.extract_strided_slice %8 {offsets = [0, 0], sizes = [8, 128], strides = [1, 1]} : vector<64x128xf32> to vector<8x128xf32>
    %cst_14 = arith.constant dense<0.000000e+00> : vector<8x128xf32>
    %15 = tpu.matmul %12, %10, %cst_14 {dimension_numbers = #tpu.dot_dimension_numbers<[1], [0], [0], [1], [0, 0, 1, 1], [], []>} : vector<8x32xf32>, vector<32x128xf32>, vector<8x128xf32> -> vector<8x128xf32>
    %16 = arith.addf %14, %15 : vector<8x128xf32>
    %17 = arith.negf %16 : vector<8x128xf32>
    %18 = math.exp %17 : vector<8x128xf32>
    %cst_15 = arith.constant 1.000000e+00 : f32
    %19 = vector.broadcast %cst_15 : f32 to vector<8x128xf32>
    %20 = arith.addf %19, %18 : vector<8x128xf32>
    %21 = arith.divf %19, %20 : vector<8x128xf32>
    %22 = math.tanh %16 : vector<8x128xf32>
    %23 = vector.extract_strided_slice %21 {offsets = [0, 0], sizes = [8, 32], strides = [1, 1]} : vector<8x128xf32> to vector<8x32xf32>
    %24 = vector.extract_strided_slice %21 {offsets = [0, 32], sizes = [8, 32], strides = [1, 1]} : vector<8x128xf32> to vector<8x32xf32>
    %25 = vector.extract_strided_slice %22 {offsets = [0, 64], sizes = [8, 32], strides = [1, 1]} : vector<8x128xf32> to vector<8x32xf32>
    %26 = vector.extract_strided_slice %21 {offsets = [0, 96], sizes = [8, 32], strides = [1, 1]} : vector<8x128xf32> to vector<8x32xf32>
    %27 = arith.mulf %24, %13 : vector<8x32xf32>
    %28 = arith.mulf %23, %25 : vector<8x32xf32>
    %29 = arith.addf %27, %28 : vector<8x32xf32>
    %30 = math.tanh %29 : vector<8x32xf32>
    %31 = arith.mulf %26, %30 : vector<8x32xf32>
    %c0_i32_16 = arith.constant 0 : i32
    %32 = arith.addi %11, %c0_i32_16 : i32
    %33 = vector.broadcast %32 : i32 to vector<8x1xi32>
    %34 = arith.cmpi sgt, %9, %33 : vector<8x1xi32>
    %35 = vector.shape_cast %34 : vector<8x1xi1> to vector<8x1xi1>
    %36 = vector.broadcast %35 : vector<8x1xi1> to vector<8x32xi1>
    %37 = arith.select %36, %31, %12 : vector<8x32xi1>, vector<8x32xf32>
    %38 = vector.shape_cast %34 : vector<8x1xi1> to vector<8x1xi1>
    %39 = vector.broadcast %38 : vector<8x1xi1> to vector<8x32xi1>
    %40 = arith.select %39, %29, %13 : vector<8x32xi1>, vector<8x32xf32>
    %cst_17 = arith.constant 0.000000e+00 : f32
    %41 = vector.shape_cast %34 : vector<8x1xi1> to vector<8x1xi1>
    %42 = vector.broadcast %41 : vector<8x1xi1> to vector<8x32xi1>
    %43 = vector.broadcast %cst_17 : f32 to vector<8x32xf32>
    %44 = arith.select %42, %31, %43 : vector<8x32xi1>, vector<8x32xf32>
    %45 = vector.extract_strided_slice %8 {offsets = [8, 0], sizes = [8, 128], strides = [1, 1]} : vector<64x128xf32> to vector<8x128xf32>
    %cst_18 = arith.constant dense<0.000000e+00> : vector<8x128xf32>
    %46 = tpu.matmul %37, %10, %cst_18 {dimension_numbers = #tpu.dot_dimension_numbers<[1], [0], [0], [1], [0, 0, 1, 1], [], []>} : vector<8x32xf32>, vector<32x128xf32>, vector<8x128xf32> -> vector<8x128xf32>
    %47 = arith.addf %45, %46 : vector<8x128xf32>
    %48 = arith.negf %47 : vector<8x128xf32>
    %49 = math.exp %48 : vector<8x128xf32>
    %cst_19 = arith.constant 1.000000e+00 : f32
    %50 = vector.broadcast %cst_19 : f32 to vector<8x128xf32>
    %51 = arith.addf %50, %49 : vector<8x128xf32>
    %52 = arith.divf %50, %51 : vector<8x128xf32>
    %53 = math.tanh %47 : vector<8x128xf32>
    %54 = vector.extract_strided_slice %52 {offsets = [0, 0], sizes = [8, 32], strides = [1, 1]} : vector<8x128xf32> to vector<8x32xf32>
    %55 = vector.extract_strided_slice %52 {offsets = [0, 32], sizes = [8, 32], strides = [1, 1]} : vector<8x128xf32> to vector<8x32xf32>
    %56 = vector.extract_strided_slice %53 {offsets = [0, 64], sizes = [8, 32], strides = [1, 1]} : vector<8x128xf32> to vector<8x32xf32>
    %57 = vector.extract_strided_slice %52 {offsets = [0, 96], sizes = [8, 32], strides = [1, 1]} : vector<8x128xf32> to vector<8x32xf32>
    %58 = arith.mulf %55, %40 : vector<8x32xf32>
    %59 = arith.mulf %54, %56 : vector<8x32xf32>
    %60 = arith.addf %58, %59 : vector<8x32xf32>
    %61 = math.tanh %60 : vector<8x32xf32>
    %62 = arith.mulf %57, %61 : vector<8x32xf32>
    %c1_i32 = arith.constant 1 : i32
    %63 = arith.addi %11, %c1_i32 : i32
    %64 = vector.broadcast %63 : i32 to vector<8x1xi32>
    %65 = arith.cmpi sgt, %9, %64 : vector<8x1xi32>
    %66 = vector.shape_cast %65 : vector<8x1xi1> to vector<8x1xi1>
    %67 = vector.broadcast %66 : vector<8x1xi1> to vector<8x32xi1>
    %68 = arith.select %67, %62, %37 : vector<8x32xi1>, vector<8x32xf32>
    %69 = vector.shape_cast %65 : vector<8x1xi1> to vector<8x1xi1>
    %70 = vector.broadcast %69 : vector<8x1xi1> to vector<8x32xi1>
    %71 = arith.select %70, %60, %40 : vector<8x32xi1>, vector<8x32xf32>
    %cst_20 = arith.constant 0.000000e+00 : f32
    %72 = vector.shape_cast %65 : vector<8x1xi1> to vector<8x1xi1>
    %73 = vector.broadcast %72 : vector<8x1xi1> to vector<8x32xi1>
    %74 = vector.broadcast %cst_20 : f32 to vector<8x32xf32>
    %75 = arith.select %73, %62, %74 : vector<8x32xi1>, vector<8x32xf32>
    %76 = vector.extract_strided_slice %8 {offsets = [16, 0], sizes = [8, 128], strides = [1, 1]} : vector<64x128xf32> to vector<8x128xf32>
    %cst_21 = arith.constant dense<0.000000e+00> : vector<8x128xf32>
    %77 = tpu.matmul %68, %10, %cst_21 {dimension_numbers = #tpu.dot_dimension_numbers<[1], [0], [0], [1], [0, 0, 1, 1], [], []>} : vector<8x32xf32>, vector<32x128xf32>, vector<8x128xf32> -> vector<8x128xf32>
    %78 = arith.addf %76, %77 : vector<8x128xf32>
    %79 = arith.negf %78 : vector<8x128xf32>
    %80 = math.exp %79 : vector<8x128xf32>
    %cst_22 = arith.constant 1.000000e+00 : f32
    %81 = vector.broadcast %cst_22 : f32 to vector<8x128xf32>
    %82 = arith.addf %81, %80 : vector<8x128xf32>
    %83 = arith.divf %81, %82 : vector<8x128xf32>
    %84 = math.tanh %78 : vector<8x128xf32>
    %85 = vector.extract_strided_slice %83 {offsets = [0, 0], sizes = [8, 32], strides = [1, 1]} : vector<8x128xf32> to vector<8x32xf32>
    %86 = vector.extract_strided_slice %83 {offsets = [0, 32], sizes = [8, 32], strides = [1, 1]} : vector<8x128xf32> to vector<8x32xf32>
    %87 = vector.extract_strided_slice %84 {offsets = [0, 64], sizes = [8, 32], strides = [1, 1]} : vector<8x128xf32> to vector<8x32xf32>
    %88 = vector.extract_strided_slice %83 {offsets = [0, 96], sizes = [8, 32], strides = [1, 1]} : vector<8x128xf32> to vector<8x32xf32>
    %89 = arith.mulf %86, %71 : vector<8x32xf32>
    %90 = arith.mulf %85, %87 : vector<8x32xf32>
    %91 = arith.addf %89, %90 : vector<8x32xf32>
    %92 = math.tanh %91 : vector<8x32xf32>
    %93 = arith.mulf %88, %92 : vector<8x32xf32>
    %c2_i32 = arith.constant 2 : i32
    %94 = arith.addi %11, %c2_i32 : i32
    %95 = vector.broadcast %94 : i32 to vector<8x1xi32>
    %96 = arith.cmpi sgt, %9, %95 : vector<8x1xi32>
    %97 = vector.shape_cast %96 : vector<8x1xi1> to vector<8x1xi1>
    %98 = vector.broadcast %97 : vector<8x1xi1> to vector<8x32xi1>
    %99 = arith.select %98, %93, %68 : vector<8x32xi1>, vector<8x32xf32>
    %100 = vector.shape_cast %96 : vector<8x1xi1> to vector<8x1xi1>
    %101 = vector.broadcast %100 : vector<8x1xi1> to vector<8x32xi1>
    %102 = arith.select %101, %91, %71 : vector<8x32xi1>, vector<8x32xf32>
    %cst_23 = arith.constant 0.000000e+00 : f32
    %103 = vector.shape_cast %96 : vector<8x1xi1> to vector<8x1xi1>
    %104 = vector.broadcast %103 : vector<8x1xi1> to vector<8x32xi1>
    %105 = vector.broadcast %cst_23 : f32 to vector<8x32xf32>
    %106 = arith.select %104, %93, %105 : vector<8x32xi1>, vector<8x32xf32>
    %107 = vector.extract_strided_slice %8 {offsets = [24, 0], sizes = [8, 128], strides = [1, 1]} : vector<64x128xf32> to vector<8x128xf32>
    %cst_24 = arith.constant dense<0.000000e+00> : vector<8x128xf32>
    %108 = tpu.matmul %99, %10, %cst_24 {dimension_numbers = #tpu.dot_dimension_numbers<[1], [0], [0], [1], [0, 0, 1, 1], [], []>} : vector<8x32xf32>, vector<32x128xf32>, vector<8x128xf32> -> vector<8x128xf32>
    %109 = arith.addf %107, %108 : vector<8x128xf32>
    %110 = arith.negf %109 : vector<8x128xf32>
    %111 = math.exp %110 : vector<8x128xf32>
    %cst_25 = arith.constant 1.000000e+00 : f32
    %112 = vector.broadcast %cst_25 : f32 to vector<8x128xf32>
    %113 = arith.addf %112, %111 : vector<8x128xf32>
    %114 = arith.divf %112, %113 : vector<8x128xf32>
    %115 = math.tanh %109 : vector<8x128xf32>
    %116 = vector.extract_strided_slice %114 {offsets = [0, 0], sizes = [8, 32], strides = [1, 1]} : vector<8x128xf32> to vector<8x32xf32>
    %117 = vector.extract_strided_slice %114 {offsets = [0, 32], sizes = [8, 32], strides = [1, 1]} : vector<8x128xf32> to vector<8x32xf32>
    %118 = vector.extract_strided_slice %115 {offsets = [0, 64], sizes = [8, 32], strides = [1, 1]} : vector<8x128xf32> to vector<8x32xf32>
    %119 = vector.extract_strided_slice %114 {offsets = [0, 96], sizes = [8, 32], strides = [1, 1]} : vector<8x128xf32> to vector<8x32xf32>
    %120 = arith.mulf %117, %102 : vector<8x32xf32>
    %121 = arith.mulf %116, %118 : vector<8x32xf32>
    %122 = arith.addf %120, %121 : vector<8x32xf32>
    %123 = math.tanh %122 : vector<8x32xf32>
    %124 = arith.mulf %119, %123 : vector<8x32xf32>
    %c3_i32 = arith.constant 3 : i32
    %125 = arith.addi %11, %c3_i32 : i32
    %126 = vector.broadcast %125 : i32 to vector<8x1xi32>
    %127 = arith.cmpi sgt, %9, %126 : vector<8x1xi32>
    %128 = vector.shape_cast %127 : vector<8x1xi1> to vector<8x1xi1>
    %129 = vector.broadcast %128 : vector<8x1xi1> to vector<8x32xi1>
    %130 = arith.select %129, %124, %99 : vector<8x32xi1>, vector<8x32xf32>
    %131 = vector.shape_cast %127 : vector<8x1xi1> to vector<8x1xi1>
    %132 = vector.broadcast %131 : vector<8x1xi1> to vector<8x32xi1>
    %133 = arith.select %132, %122, %102 : vector<8x32xi1>, vector<8x32xf32>
    %cst_26 = arith.constant 0.000000e+00 : f32
    %134 = vector.shape_cast %127 : vector<8x1xi1> to vector<8x1xi1>
    %135 = vector.broadcast %134 : vector<8x1xi1> to vector<8x32xi1>
    %136 = vector.broadcast %cst_26 : f32 to vector<8x32xf32>
    %137 = arith.select %135, %124, %136 : vector<8x32xi1>, vector<8x32xf32>
    %138 = vector.extract_strided_slice %8 {offsets = [32, 0], sizes = [8, 128], strides = [1, 1]} : vector<64x128xf32> to vector<8x128xf32>
    %cst_27 = arith.constant dense<0.000000e+00> : vector<8x128xf32>
    %139 = tpu.matmul %130, %10, %cst_27 {dimension_numbers = #tpu.dot_dimension_numbers<[1], [0], [0], [1], [0, 0, 1, 1], [], []>} : vector<8x32xf32>, vector<32x128xf32>, vector<8x128xf32> -> vector<8x128xf32>
    %140 = arith.addf %138, %139 : vector<8x128xf32>
    %141 = arith.negf %140 : vector<8x128xf32>
    %142 = math.exp %141 : vector<8x128xf32>
    %cst_28 = arith.constant 1.000000e+00 : f32
    %143 = vector.broadcast %cst_28 : f32 to vector<8x128xf32>
    %144 = arith.addf %143, %142 : vector<8x128xf32>
    %145 = arith.divf %143, %144 : vector<8x128xf32>
    %146 = math.tanh %140 : vector<8x128xf32>
    %147 = vector.extract_strided_slice %145 {offsets = [0, 0], sizes = [8, 32], strides = [1, 1]} : vector<8x128xf32> to vector<8x32xf32>
    %148 = vector.extract_strided_slice %145 {offsets = [0, 32], sizes = [8, 32], strides = [1, 1]} : vector<8x128xf32> to vector<8x32xf32>
    %149 = vector.extract_strided_slice %146 {offsets = [0, 64], sizes = [8, 32], strides = [1, 1]} : vector<8x128xf32> to vector<8x32xf32>
    %150 = vector.extract_strided_slice %145 {offsets = [0, 96], sizes = [8, 32], strides = [1, 1]} : vector<8x128xf32> to vector<8x32xf32>
    %151 = arith.mulf %148, %133 : vector<8x32xf32>
    %152 = arith.mulf %147, %149 : vector<8x32xf32>
    %153 = arith.addf %151, %152 : vector<8x32xf32>
    %154 = math.tanh %153 : vector<8x32xf32>
    %155 = arith.mulf %150, %154 : vector<8x32xf32>
    %c4_i32 = arith.constant 4 : i32
    %156 = arith.addi %11, %c4_i32 : i32
    %157 = vector.broadcast %156 : i32 to vector<8x1xi32>
    %158 = arith.cmpi sgt, %9, %157 : vector<8x1xi32>
    %159 = vector.shape_cast %158 : vector<8x1xi1> to vector<8x1xi1>
    %160 = vector.broadcast %159 : vector<8x1xi1> to vector<8x32xi1>
    %161 = arith.select %160, %155, %130 : vector<8x32xi1>, vector<8x32xf32>
    %162 = vector.shape_cast %158 : vector<8x1xi1> to vector<8x1xi1>
    %163 = vector.broadcast %162 : vector<8x1xi1> to vector<8x32xi1>
    %164 = arith.select %163, %153, %133 : vector<8x32xi1>, vector<8x32xf32>
    %cst_29 = arith.constant 0.000000e+00 : f32
    %165 = vector.shape_cast %158 : vector<8x1xi1> to vector<8x1xi1>
    %166 = vector.broadcast %165 : vector<8x1xi1> to vector<8x32xi1>
    %167 = vector.broadcast %cst_29 : f32 to vector<8x32xf32>
    %168 = arith.select %166, %155, %167 : vector<8x32xi1>, vector<8x32xf32>
    %169 = vector.extract_strided_slice %8 {offsets = [40, 0], sizes = [8, 128], strides = [1, 1]} : vector<64x128xf32> to vector<8x128xf32>
    %cst_30 = arith.constant dense<0.000000e+00> : vector<8x128xf32>
    %170 = tpu.matmul %161, %10, %cst_30 {dimension_numbers = #tpu.dot_dimension_numbers<[1], [0], [0], [1], [0, 0, 1, 1], [], []>} : vector<8x32xf32>, vector<32x128xf32>, vector<8x128xf32> -> vector<8x128xf32>
    %171 = arith.addf %169, %170 : vector<8x128xf32>
    %172 = arith.negf %171 : vector<8x128xf32>
    %173 = math.exp %172 : vector<8x128xf32>
    %cst_31 = arith.constant 1.000000e+00 : f32
    %174 = vector.broadcast %cst_31 : f32 to vector<8x128xf32>
    %175 = arith.addf %174, %173 : vector<8x128xf32>
    %176 = arith.divf %174, %175 : vector<8x128xf32>
    %177 = math.tanh %171 : vector<8x128xf32>
    %178 = vector.extract_strided_slice %176 {offsets = [0, 0], sizes = [8, 32], strides = [1, 1]} : vector<8x128xf32> to vector<8x32xf32>
    %179 = vector.extract_strided_slice %176 {offsets = [0, 32], sizes = [8, 32], strides = [1, 1]} : vector<8x128xf32> to vector<8x32xf32>
    %180 = vector.extract_strided_slice %177 {offsets = [0, 64], sizes = [8, 32], strides = [1, 1]} : vector<8x128xf32> to vector<8x32xf32>
    %181 = vector.extract_strided_slice %176 {offsets = [0, 96], sizes = [8, 32], strides = [1, 1]} : vector<8x128xf32> to vector<8x32xf32>
    %182 = arith.mulf %179, %164 : vector<8x32xf32>
    %183 = arith.mulf %178, %180 : vector<8x32xf32>
    %184 = arith.addf %182, %183 : vector<8x32xf32>
    %185 = math.tanh %184 : vector<8x32xf32>
    %186 = arith.mulf %181, %185 : vector<8x32xf32>
    %c5_i32 = arith.constant 5 : i32
    %187 = arith.addi %11, %c5_i32 : i32
    %188 = vector.broadcast %187 : i32 to vector<8x1xi32>
    %189 = arith.cmpi sgt, %9, %188 : vector<8x1xi32>
    %190 = vector.shape_cast %189 : vector<8x1xi1> to vector<8x1xi1>
    %191 = vector.broadcast %190 : vector<8x1xi1> to vector<8x32xi1>
    %192 = arith.select %191, %186, %161 : vector<8x32xi1>, vector<8x32xf32>
    %193 = vector.shape_cast %189 : vector<8x1xi1> to vector<8x1xi1>
    %194 = vector.broadcast %193 : vector<8x1xi1> to vector<8x32xi1>
    %195 = arith.select %194, %184, %164 : vector<8x32xi1>, vector<8x32xf32>
    %cst_32 = arith.constant 0.000000e+00 : f32
    %196 = vector.shape_cast %189 : vector<8x1xi1> to vector<8x1xi1>
    %197 = vector.broadcast %196 : vector<8x1xi1> to vector<8x32xi1>
    %198 = vector.broadcast %cst_32 : f32 to vector<8x32xf32>
    %199 = arith.select %197, %186, %198 : vector<8x32xi1>, vector<8x32xf32>
    %200 = vector.extract_strided_slice %8 {offsets = [48, 0], sizes = [8, 128], strides = [1, 1]} : vector<64x128xf32> to vector<8x128xf32>
    %cst_33 = arith.constant dense<0.000000e+00> : vector<8x128xf32>
    %201 = tpu.matmul %192, %10, %cst_33 {dimension_numbers = #tpu.dot_dimension_numbers<[1], [0], [0], [1], [0, 0, 1, 1], [], []>} : vector<8x32xf32>, vector<32x128xf32>, vector<8x128xf32> -> vector<8x128xf32>
    %202 = arith.addf %200, %201 : vector<8x128xf32>
    %203 = arith.negf %202 : vector<8x128xf32>
    %204 = math.exp %203 : vector<8x128xf32>
    %cst_34 = arith.constant 1.000000e+00 : f32
    %205 = vector.broadcast %cst_34 : f32 to vector<8x128xf32>
    %206 = arith.addf %205, %204 : vector<8x128xf32>
    %207 = arith.divf %205, %206 : vector<8x128xf32>
    %208 = math.tanh %202 : vector<8x128xf32>
    %209 = vector.extract_strided_slice %207 {offsets = [0, 0], sizes = [8, 32], strides = [1, 1]} : vector<8x128xf32> to vector<8x32xf32>
    %210 = vector.extract_strided_slice %207 {offsets = [0, 32], sizes = [8, 32], strides = [1, 1]} : vector<8x128xf32> to vector<8x32xf32>
    %211 = vector.extract_strided_slice %208 {offsets = [0, 64], sizes = [8, 32], strides = [1, 1]} : vector<8x128xf32> to vector<8x32xf32>
    %212 = vector.extract_strided_slice %207 {offsets = [0, 96], sizes = [8, 32], strides = [1, 1]} : vector<8x128xf32> to vector<8x32xf32>
    %213 = arith.mulf %210, %195 : vector<8x32xf32>
    %214 = arith.mulf %209, %211 : vector<8x32xf32>
    %215 = arith.addf %213, %214 : vector<8x32xf32>
    %216 = math.tanh %215 : vector<8x32xf32>
    %217 = arith.mulf %212, %216 : vector<8x32xf32>
    %c6_i32 = arith.constant 6 : i32
    %218 = arith.addi %11, %c6_i32 : i32
    %219 = vector.broadcast %218 : i32 to vector<8x1xi32>
    %220 = arith.cmpi sgt, %9, %219 : vector<8x1xi32>
    %221 = vector.shape_cast %220 : vector<8x1xi1> to vector<8x1xi1>
    %222 = vector.broadcast %221 : vector<8x1xi1> to vector<8x32xi1>
    %223 = arith.select %222, %217, %192 : vector<8x32xi1>, vector<8x32xf32>
    %224 = vector.shape_cast %220 : vector<8x1xi1> to vector<8x1xi1>
    %225 = vector.broadcast %224 : vector<8x1xi1> to vector<8x32xi1>
    %226 = arith.select %225, %215, %195 : vector<8x32xi1>, vector<8x32xf32>
    %cst_35 = arith.constant 0.000000e+00 : f32
    %227 = vector.shape_cast %220 : vector<8x1xi1> to vector<8x1xi1>
    %228 = vector.broadcast %227 : vector<8x1xi1> to vector<8x32xi1>
    %229 = vector.broadcast %cst_35 : f32 to vector<8x32xf32>
    %230 = arith.select %228, %217, %229 : vector<8x32xi1>, vector<8x32xf32>
    %231 = vector.extract_strided_slice %8 {offsets = [56, 0], sizes = [8, 128], strides = [1, 1]} : vector<64x128xf32> to vector<8x128xf32>
    %cst_36 = arith.constant dense<0.000000e+00> : vector<8x128xf32>
    %232 = tpu.matmul %223, %10, %cst_36 {dimension_numbers = #tpu.dot_dimension_numbers<[1], [0], [0], [1], [0, 0, 1, 1], [], []>} : vector<8x32xf32>, vector<32x128xf32>, vector<8x128xf32> -> vector<8x128xf32>
    %233 = arith.addf %231, %232 : vector<8x128xf32>
    %234 = arith.negf %233 : vector<8x128xf32>
    %235 = math.exp %234 : vector<8x128xf32>
    %cst_37 = arith.constant 1.000000e+00 : f32
    %236 = vector.broadcast %cst_37 : f32 to vector<8x128xf32>
    %237 = arith.addf %236, %235 : vector<8x128xf32>
    %238 = arith.divf %236, %237 : vector<8x128xf32>
    %239 = math.tanh %233 : vector<8x128xf32>
    %240 = vector.extract_strided_slice %238 {offsets = [0, 0], sizes = [8, 32], strides = [1, 1]} : vector<8x128xf32> to vector<8x32xf32>
    %241 = vector.extract_strided_slice %238 {offsets = [0, 32], sizes = [8, 32], strides = [1, 1]} : vector<8x128xf32> to vector<8x32xf32>
    %242 = vector.extract_strided_slice %239 {offsets = [0, 64], sizes = [8, 32], strides = [1, 1]} : vector<8x128xf32> to vector<8x32xf32>
    %243 = vector.extract_strided_slice %238 {offsets = [0, 96], sizes = [8, 32], strides = [1, 1]} : vector<8x128xf32> to vector<8x32xf32>
    %244 = arith.mulf %241, %226 : vector<8x32xf32>
    %245 = arith.mulf %240, %242 : vector<8x32xf32>
    %246 = arith.addf %244, %245 : vector<8x32xf32>
    %247 = math.tanh %246 : vector<8x32xf32>
    %248 = arith.mulf %243, %247 : vector<8x32xf32>
    %c7_i32 = arith.constant 7 : i32
    %249 = arith.addi %11, %c7_i32 : i32
    %250 = vector.broadcast %249 : i32 to vector<8x1xi32>
    %251 = arith.cmpi sgt, %9, %250 : vector<8x1xi32>
    %252 = vector.shape_cast %251 : vector<8x1xi1> to vector<8x1xi1>
    %253 = vector.broadcast %252 : vector<8x1xi1> to vector<8x32xi1>
    %254 = arith.select %253, %248, %223 : vector<8x32xi1>, vector<8x32xf32>
    %255 = vector.shape_cast %251 : vector<8x1xi1> to vector<8x1xi1>
    %256 = vector.broadcast %255 : vector<8x1xi1> to vector<8x32xi1>
    %257 = arith.select %256, %246, %226 : vector<8x32xi1>, vector<8x32xf32>
    %cst_38 = arith.constant 0.000000e+00 : f32
    %258 = vector.shape_cast %251 : vector<8x1xi1> to vector<8x1xi1>
    %259 = vector.broadcast %258 : vector<8x1xi1> to vector<8x32xi1>
    %260 = vector.broadcast %cst_38 : f32 to vector<8x32xf32>
    %261 = arith.select %259, %248, %260 : vector<8x32xi1>, vector<8x32xf32>
    %c0_39 = arith.constant 0 : index
    %c0_40 = arith.constant 0 : index
    %262 = vector.load %arg9[%c0_39, %c0_40] : memref<8x32xf32, #tpu.memory_space<vmem>>, vector<8x32xf32>
    tpu.vector_store %arg9[%c0_39, %c0_40], %254 {strides = array<i32>} : memref<8x32xf32, #tpu.memory_space<vmem>>, vector<8x32xf32>,
    %c0_41 = arith.constant 0 : index
    %c0_42 = arith.constant 0 : index
    %263 = vector.load %arg10[%c0_41, %c0_42] : memref<8x32xf32, #tpu.memory_space<vmem>>, vector<8x32xf32>
    tpu.vector_store %arg10[%c0_41, %c0_42], %257 {strides = array<i32>} : memref<8x32xf32, #tpu.memory_space<vmem>>, vector<8x32xf32>,
    %264 = tpu.concatenate %44, %75, %106, %137, %168, %199, %230, %261 in 1 : vector<8x32xf32>, vector<8x32xf32>, vector<8x32xf32>, vector<8x32xf32>, vector<8x32xf32>, vector<8x32xf32>, vector<8x32xf32>, vector<8x32xf32> -> vector<8x256xf32>
    %c0_43 = arith.constant 0 : index
    %c0_44 = arith.constant 0 : index
    %265 = vector.load %arg6[%c0_43, %c0_44] : memref<8x256xf32, #tpu.memory_space<vmem>>, vector<8x256xf32>
    tpu.vector_store %arg6[%c0_43, %c0_44], %264 {strides = array<i32>} : memref<8x256xf32, #tpu.memory_space<vmem>>, vector<8x256xf32>,
    %c0_i32_45 = arith.constant 0 : i32
    %266 = arith.cmpi eq, %arg0, %c0_i32_45 : i32
    %267 = arith.extui %266 : i1 to i32
    %c0_i32_46 = arith.constant 0 : i32
    %268 = arith.cmpi ne, %267, %c0_i32_46 : i32
    scf.if %268 {
      %c0_47 = arith.constant 0 : index
      %c0_48 = arith.constant 0 : index
      %269 = vector.load %arg7[%c0_47, %c0_48] : memref<8x32xf32, #tpu.memory_space<vmem>>, vector<8x32xf32>
      tpu.vector_store %arg7[%c0_47, %c0_48], %254 {strides = array<i32>} : memref<8x32xf32, #tpu.memory_space<vmem>>, vector<8x32xf32>,
      %c0_49 = arith.constant 0 : index
      %c0_50 = arith.constant 0 : index
      %270 = vector.load %arg8[%c0_49, %c0_50] : memref<8x32xf32, #tpu.memory_space<vmem>>, vector<8x32xf32>
      tpu.vector_store %arg8[%c0_49, %c0_50], %257 {strides = array<i32>} : memref<8x32xf32, #tpu.memory_space<vmem>>, vector<8x32xf32>,
    } else {
    }
    return
  }
  func.func @transform_0(%arg0: i32) -> (i32, i32) {
    %c0_i32 = arith.constant 0 : i32
    %c0_i32_0 = arith.constant 0 : i32
    return %arg0, %c0_i32 : i32, i32
  }
  func.func @transform_1(%arg0: i32) -> (i32, i32) {
    %c0_i32 = arith.constant 0 : i32
    %c0_i32_0 = arith.constant 0 : i32
    %c0_i32_1 = arith.constant 0 : i32
    return %c0_i32, %c0_i32_0 : i32, i32
  }
  func.func @transform_2(%arg0: i32) -> (i32, i32) {
    %c0_i32 = arith.constant 0 : i32
    %c0_i32_0 = arith.constant 0 : i32
    %c0_i32_1 = arith.constant 0 : i32
    return %c0_i32, %c0_i32_0 : i32, i32
  }
  func.func @transform_3(%arg0: i32) -> (i32, i32) {
    %c0_i32 = arith.constant 0 : i32
    %c0_i32_0 = arith.constant 0 : i32
    %c0_i32_1 = arith.constant 0 : i32
    return %c0_i32, %c0_i32_0 : i32, i32
  }
  func.func @transform_4(%arg0: i32) -> (i32, i32) {
    %c0_i32 = arith.constant 0 : i32
    %c0_i32_0 = arith.constant 0 : i32
    %c0_i32_1 = arith.constant 0 : i32
    return %c0_i32, %c0_i32_0 : i32, i32
  }
  func.func @transform_5(%arg0: i32) -> (i32, i32) {
    %c0_i32 = arith.constant 0 : i32
    %c0_i32_0 = arith.constant 0 : i32
    return %c0_i32, %arg0 : i32, i32
  }
  func.func @transform_6(%arg0: i32) -> (i32, i32) {
    %c0_i32 = arith.constant 0 : i32
    %c0_i32_0 = arith.constant 0 : i32
    %c0_i32_1 = arith.constant 0 : i32
    return %c0_i32, %c0_i32_0 : i32, i32
  }
  func.func @transform_7(%arg0: i32) -> (i32, i32) {
    %c0_i32 = arith.constant 0 : i32
    %c0_i32_0 = arith.constant 0 : i32
    %c0_i32_1 = arith.constant 0 : i32
    return %c0_i32, %c0_i32_0 : i32, i32
  }
}

</mosaic_0001>

<llo_original>
// kernel: tpu_custom_call.1
$region0: #{tpu_custom_call.1}
  #allocation0 [shape = 'u32[]', space=smem, size = 0x4, offset = 0x4, fixed_abs, tag = 'smem constant byte address 0x4 - core index']
  #allocation1 [shape = 'u32[72,128]{1,0:T(1,128)}', space=vmem, size = 0x9000, scoped, tag = 'internal scratch']
  #allocation2 [shape = 'f32[8,32]{1,0:T(8,128)}', space=vmem, size = 0x1000, scoped, tag = 'scratch operand']
  #allocation3 [shape = 'f32[8,32]{1,0:T(8,128)}', space=vmem, size = 0x1000, scoped, tag = 'scratch operand']
  %s0 = inlined_call_operand.vmem [shape: f32[64,32], index: 0, kind: input, shape index: {}]
  %s1 = inlined_call_operand.vmem [shape: s32[8,1], index: 1, kind: input, shape index: {}]
  %s2 = inlined_call_operand.vmem [shape: f32[32,128], index: 2, kind: input, shape index: {}]
  %s3 = inlined_call_operand.vmem [shape: f32[32,128], index: 3, kind: input, shape index: {}]
  %s4 = inlined_call_operand.vmem [shape: f32[1,128], index: 4, kind: input, shape index: {}]
  %s5 = inlined_call_operand.hbm [shape: f32[8,256], index: 5, kind: output, shape index: {0}]
  %s6 = inlined_call_operand.hbm [shape: f32[8,32], index: 6, kind: output, shape index: {1}]
  %s7 = inlined_call_operand.hbm [shape: f32[8,32], index: 7, kind: output, shape index: {2}]
  %8 = xla_tuple %s5, %s6, %s7
  %s9 = sld [smem:[#allocation0]]
  $region54: #{tpu_custom_call.1} parent=0
    _
  %s11 = ssub.s32 1, %s9
  %s12 = scalar_select 0, %s11, %s9
  $region1: #{tpu_custom_call.1} parent=0
    #allocation4 [shape = 'u8[8192]{0}', space=vmem, size = 0x2000, scoped, tag = 'output window, operand 0, single buffered']
    #allocation5 [shape = 's32[1]{0}', space=sflag, size = 0x4, scoped, tag = 'scoped memory for tpu_custom_call.1']
    #allocation6 [shape = 'u8[4096]{0}', space=vmem, size = 0x1000, scoped, tag = 'output window, operand 1, single buffered']
    #allocation7 [shape = 's32[1]{0}', space=sflag, size = 0x4, scoped, tag = 'scoped memory for tpu_custom_call.1']
    #allocation8 [shape = 'u8[4096]{0}', space=vmem, size = 0x1000, scoped, tag = 'output window, operand 2, single buffered']
    %13 = vsyncpa [#allocation5], 0
    %14 = vsyncpa [#allocation7], 0
    // Predicated region
    $region2: #{tpu_custom_call.1} parent=1 // pred_check
      _
    $region3: #{tpu_custom_call.1} parent=1 // pred_check_branch
      %16 = sbr.rel (0) target = $region5
    $region4: #{tpu_custom_call.1} parent=1 // pred_region
      _
    $region5: #{tpu_custom_call.1} parent=1 // pred_fallthru
      _
    // Predicated region
    $region6: #{tpu_custom_call.1} parent=1 // pred_check
      _
    $region7: #{tpu_custom_call.1} parent=1 // pred_check_branch
      %18 = sbr.rel (0) target = $region9
    $region8: #{tpu_custom_call.1} parent=1 // pred_region
      _
    $region9: #{tpu_custom_call.1} parent=1 // pred_fallthru
      _
    // Predicated region
    $region10: #{tpu_custom_call.1} parent=1 // pred_check
      _
    $region11: #{tpu_custom_call.1} parent=1 // pred_check_branch
      %20 = sbr.rel (0) target = $region13
    $region12: #{tpu_custom_call.1} parent=1 // pred_region
      _
    $region13: #{tpu_custom_call.1} parent=1 // pred_fallthru
      _
    // Predicated region
    $region14: #{tpu_custom_call.1} parent=1 // pred_check
      _
    $region15: #{tpu_custom_call.1} parent=1 // pred_check_branch
      %22 = sbr.rel (0) target = $region17
    $region16: #{tpu_custom_call.1} parent=1 // pred_region
      _
    $region17: #{tpu_custom_call.1} parent=1 // pred_fallthru
      _
    // Predicated region
    $region18: #{tpu_custom_call.1} parent=1 // pred_check
      _
    $region19: #{tpu_custom_call.1} parent=1 // pred_check_branch
      %24 = sbr.rel (0) target = $region21
    $region20: #{tpu_custom_call.1} parent=1 // pred_region
      _
    $region21: #{tpu_custom_call.1} parent=1 // pred_fallthru
      _
    %p25 = scmp.eq.s32.totalorder 0, 0
    // Predicated region
    $region22: #{tpu_custom_call.1} parent=1 // pred_check
      %p26 = pneg %p25
    $region23: #{tpu_custom_call.1} parent=1 // pred_check_branch
      %28 = sbr.rel (%p26) target = $region25
    $region24: #{tpu_custom_call.1} parent=1 // pred_region
      %vm29 = vcmask 261120
      %30 = vst.msk [vmem:[#allocation2] sm:$0xff] %vm29, 0.0
      %31 = vst.msk [vmem:[#allocation3] sm:$0xff] %vm29, 0.0
    $region25: #{tpu_custom_call.1} parent=1 // pred_fallthru
      _
    %v32 = vld [vmem:[%s0] sm:$0xff]
    %v33 = vld [vmem:[%s0 + $0x8] sm:$0xff]
    %v34 = vld [vmem:[%s0 + $0x10] sm:$0xff]
    %v35 = vld [vmem:[%s0 + $0x18] sm:$0xff]
    %v36 = vld [vmem:[%s0 + $0x20] sm:$0xff]
    %v37 = vld [vmem:[%s0 + $0x28] sm:$0xff]
    %v38 = vld [vmem:[%s0 + $0x30] sm:$0xff]
    %v39 = vld [vmem:[%s0 + $0x38] sm:$0xff]
    %v40 = vld [vmem:[%s2] sm:$0xff]
    %v41 = vld [vmem:[%s2 + $0x8] sm:$0xff]
    %v42 = vld [vmem:[%s2 + $0x10] sm:$0xff]
    %v43 = vld [vmem:[%s2 + $0x18] sm:$0xff]
    %v44 = vld [vmem:[%s4] sm:$0x1]
    %v46 = vperm.slane %v44, 0
    %vm48 = vcmask 261120
    %v50 = vsel %vm48, %v32, 0
    %v53 = vsel %vm48, %v33, 0
    %v56 = vsel %vm48, %v34, 0
    %v59 = vsel %vm48, %v35, 0
    %v62 = vsel %vm48, %v36, 0
    %v65 = vsel %vm48, %v37, 0
    %v68 = vsel %vm48, %v38, 0
    %v71 = vsel %vm48, %v39, 0
    %73 = vmatpush.msra.mxu0 0.0
    %74 = vmatpush.msra.mxu0 0.0
    %75 = vmatpush.msra.mxu0 0.0
    %76 = vmatpush.msra.mxu0 0.0
    %77 = vmatpush.msra.mxu0 0.0
    %78 = vmatpush.msra.mxu0 0.0
    %79 = vmatpush.msra.mxu0 0.0
    %80 = vmatpush.msra.mxu0 0.0
    %81 = vmatpush.msra.mxu0 0.0
    %82 = vmatpush.msra.mxu0 0.0
    %83 = vmatpush.msra.mxu0 0.0
    %84 = vmatpush.msra.mxu0 0.0
    %85 = vmatpush.msra.mxu0 %v43
    %86 = vmatpush.msra.mxu0 %v42
    %87 = vmatpush.msra.mxu0 %v41
    %88 = vmatpush.msra.mxu0 %v40
    %89 = vmatmul.f32.gmra.mxu0 %v50
    %v90 = vpop.f32.mrf.mxu0
    %v91 = vadd.f32 %v46, %v90
    %92 = vmatmul.f32.gmra.mxu0 %v53
    %v93 = vpop.f32.mrf.mxu0
    %v94 = vadd.f32 %v46, %v93
    %95 = vmatmul.f32.gmra.mxu0 %v56
    %v96 = vpop.f32.mrf.mxu0
    %v97 = vadd.f32 %v46, %v96
    %98 = vmatmul.f32.gmra.mxu0 %v59
    %v99 = vpop.f32.mrf.mxu0
    %v100 = vadd.f32 %v46, %v99
    %101 = vmatmul.f32.gmra.mxu0 %v62
    %v102 = vpop.f32.mrf.mxu0
    %v103 = vadd.f32 %v46, %v102
    %104 = vmatmul.f32.gmra.mxu0 %v65
    %v105 = vpop.f32.mrf.mxu0
    %v106 = vadd.f32 %v46, %v105
    %107 = vmatmul.f32.gmra.mxu0 %v68
    %v108 = vpop.f32.mrf.mxu0
    %v109 = vadd.f32 %v46, %v108
    %110 = vmatmul.f32.gmra.mxu0 %v71
    %v111 = vpop.f32.mrf.mxu0
    %v112 = vadd.f32 %v46, %v111
    %113 = vdwg.mxu0
    %v114 = vld [vmem:[%s1] sm:$0xff]
    %v115 = vld [vmem:[%s3] sm:$0xff]
    %v116 = vld [vmem:[%s3 + $0x8] sm:$0xff]
    %v117 = vld [vmem:[%s3 + $0x10] sm:$0xff]
    %v118 = vld [vmem:[%s3 + $0x18] sm:$0xff]
    %s119 = smul.u32 0, 8
    %v120 = vld [vmem:[#allocation2] sm:$0xff]
    %v121 = vld [vmem:[#allocation3] sm:$0xff]
    %v123 = vsel %vm48, %v120, 0
    %125 = vmatpush.msra.mxu0 0.0
    %126 = vmatpush.msra.mxu0 0.0
    %127 = vmatpush.msra.mxu0 0.0
    %128 = vmatpush.msra.mxu0 0.0
    %129 = vmatpush.msra.mxu0 0.0
    %130 = vmatpush.msra.mxu0 0.0
    %131 = vmatpush.msra.mxu0 0.0
    %132 = vmatpush.msra.mxu0 0.0
    %133 = vmatpush.msra.mxu0 0.0
    %134 = vmatpush.msra.mxu0 0.0
    %135 = vmatpush.msra.mxu0 0.0
    %136 = vmatpush.msra.mxu0 0.0
    %137 = vmatpush.msra.mxu0 %v118
    %138 = vmatpush.msra.mxu0 %v117
    %139 = vmatpush.msra.mxu0 %v116
    %140 = vmatpush.msra.mxu0 %v115
    %141 = vmatmul.f32.gmra.mxu0 %v123
    %v142 = vpop.f32.mrf.mxu0
    %v143 = vadd.f32 0.0, %v142
    %144 = vdwg.mxu0
    %v145 = vadd.f32 %v91, %v143
    %v146 = vxor.u32 %v145, 2147483648
    %v147 = vmul.f32 %v146, 1.442695
    %v148 = vpow.pop %v147
    %v149 = vadd.f32 %v148, 1.0
    %v150 = vrcp.pop %v149
    %v151 = vmul.f32 %v149, %v150
    %v152 = vsub.f32 1.0, %v151
    %v153 = vmul.f32 %v150, %v152
    %v154 = vadd.f32 %v150, %v153
    %vm155 = vweird.f32 %v149
    %vm156 = vweird.f32 %v150
    %vm157 = vmor %vm155, %vm156
    %v158 = vsel %vm157, %v150, %v154
    %v159 = vand.u32 2147483647, %v149
    %vm160 = vcmp.eq.f32.partialorder %v159, 8.507059e+37
    %v161 = vand.u32 %v149, 2147483648
    %v162 = vor.u32 1.1754944e-38, %v161
    %v163 = vsel %vm160, %v162, %v158
    %v164 = vmul.f32 1.0, %v163
    %v165 = vtanh.pop %v145
    %167 = vrot.lane.b32.xlu0 %v121, 32
    %v168 = vpop.permute.xlu0 %167
    %v170 = vmul.f32 %v164, %v168
    %172 = vrot.lane.b32.xlu0 %v165, 64
    %v173 = vpop.permute.xlu0 %172
    %v175 = vmul.f32 %v164, %v173
    %177 = vrot.lane.b32.xlu0 %v175, 32
    %v178 = vpop.permute.xlu0 %177
    %v180 = vadd.f32 %v170, %v178
    %v181 = vtanh.pop %v180
    %183 = vrot.lane.b32.xlu0 %v181, 64
    %v184 = vpop.permute.xlu0 %183
    %v186 = vmul.f32 %v164, %v184
    %v187 = vstv %s119
    %vm188 = vcmp.gt.s32.totalorder %v114, %v187
    %v189 = vsel %vm188, 1, 0
    %190 = vset.pattern.permute.xlu0 0
    %191 = vperm.xlu0 %190, %v189
    %v192 = vpop.permute.xlu0 %191
    %vm193 = vcmp.eq.s32.totalorder %v192, 1
    %194 = vrot.lane.b32.xlu0 %v120, 96
    %v195 = vpop.permute.xlu0 %194
    %v197 = vsel %vm193, %v186, %v195
    %v198 = vsel %vm193, %v180, %v168
    %v199 = vsel %vm193, %v186, 0.0
    %201 = vrot.lane.b32.xlu0 %v197, 32
    %v202 = vpop.permute.xlu0 %201
    %v203 = vsel %vm48, %v202, 0
    %205 = vmatpush.msra.mxu0 0.0
    %206 = vmatpush.msra.mxu0 0.0
    %207 = vmatpush.msra.mxu0 0.0
    %208 = vmatpush.msra.mxu0 0.0
    %209 = vmatpush.msra.mxu0 0.0
    %210 = vmatpush.msra.mxu0 0.0
    %211 = vmatpush.msra.mxu0 0.0
    %212 = vmatpush.msra.mxu0 0.0
    %213 = vmatpush.msra.mxu0 0.0
    %214 = vmatpush.msra.mxu0 0.0
    %215 = vmatpush.msra.mxu0 0.0
    %216 = vmatpush.msra.mxu0 0.0
    %217 = vmatpush.msra.mxu0 %v118
    %218 = vmatpush.msra.mxu0 %v117
    %219 = vmatpush.msra.mxu0 %v116
    %220 = vmatpush.msra.mxu0 %v115
    %221 = vmatmul.f32.gmra.mxu0 %v203
    %v222 = vpop.f32.mrf.mxu0
    %v223 = vadd.f32 0.0, %v222
    %224 = vdwg.mxu0
    %v225 = vadd.f32 %v94, %v223
    %v226 = vxor.u32 %v225, 2147483648
    %v227 = vmul.f32 %v226, 1.442695
    %v228 = vpow.pop %v227
    %v229 = vadd.f32 %v228, 1.0
    %v230 = vrcp.pop %v229
    %v231 = vmul.f32 %v229, %v230
    %v232 = vsub.f32 1.0, %v231
    %v233 = vmul.f32 %v230, %v232
    %v234 = vadd.f32 %v230, %v233
    %vm235 = vweird.f32 %v229
    %vm236 = vweird.f32 %v230
    %vm237 = vmor %vm235, %vm236
    %v238 = vsel %vm237, %v230, %v234
    %v239 = vand.u32 2147483647, %v229
    %vm240 = vcmp.eq.f32.partialorder %v239, 8.507059e+37
    %v241 = vand.u32 %v229, 2147483648
    %v242 = vor.u32 1.1754944e-38, %v241
    %v243 = vsel %vm240, %v242, %v238
    %v244 = vmul.f32 1.0, %v243
    %v245 = vtanh.pop %v225
    %v246 = vmul.f32 %v244, %v198
    %248 = vrot.lane.b32.xlu0 %v245, 64
    %v249 = vpop.permute.xlu0 %248
    %v251 = vmul.f32 %v244, %v249
    %253 = vrot.lane.b32.xlu0 %v251, 32
    %v254 = vpop.permute.xlu0 %253
    %v256 = vadd.f32 %v246, %v254
    %v257 = vtanh.pop %v256
    %259 = vrot.lane.b32.xlu0 %v257, 64
    %v260 = vpop.permute.xlu0 %259
    %v262 = vmul.f32 %v244, %v260
    %s263 = sadd.s32 %s119, 1
    %v264 = vstv %s263
    %vm265 = vcmp.gt.s32.totalorder %v114, %v264
    %v266 = vsel %vm265, 1, 0
    %267 = vset.pattern.permute.xlu0 0
    %268 = vperm.xlu0 %267, %v266
    %v269 = vpop.permute.xlu0 %268
    %vm270 = vcmp.eq.s32.totalorder %v269, 1
    %v271 = vsel %vm270, %v262, %v197
    %v272 = vsel %vm270, %v256, %v198
    %v273 = vsel %vm270, %v262, 0.0
    %275 = vrot.lane.b32.xlu0 %v271, 32
    %v276 = vpop.permute.xlu0 %275
    %v277 = vsel %vm48, %v276, 0
    %279 = vmatpush.msra.mxu0 0.0
    %280 = vmatpush.msra.mxu0 0.0
    %281 = vmatpush.msra.mxu0 0.0
    %282 = vmatpush.msra.mxu0 0.0
    %283 = vmatpush.msra.mxu0 0.0
    %284 = vmatpush.msra.mxu0 0.0
    %285 = vmatpush.msra.mxu0 0.0
    %286 = vmatpush.msra.mxu0 0.0
    %287 = vmatpush.msra.mxu0 0.0
    %288 = vmatpush.msra.mxu0 0.0
    %289 = vmatpush.msra.mxu0 0.0
    %290 = vmatpush.msra.mxu0 0.0
    %291 = vmatpush.msra.mxu0 %v118
    %292 = vmatpush.msra.mxu0 %v117
    %293 = vmatpush.msra.mxu0 %v116
    %294 = vmatpush.msra.mxu0 %v115
    %295 = vmatmul.f32.gmra.mxu0 %v277
    %v296 = vpop.f32.mrf.mxu0
    %v297 = vadd.f32 0.0, %v296
    %298 = vdwg.mxu0
    %v299 = vadd.f32 %v97, %v297
    %v300 = vxor.u32 %v299, 2147483648
    %v301 = vmul.f32 %v300, 1.442695
    %v302 = vpow.pop %v301
    %v303 = vadd.f32 %v302, 1.0
    %v304 = vrcp.pop %v303
    %v305 = vmul.f32 %v303, %v304
    %v306 = vsub.f32 1.0, %v305
    %v307 = vmul.f32 %v304, %v306
    %v308 = vadd.f32 %v304, %v307
    %vm309 = vweird.f32 %v303
    %vm310 = vweird.f32 %v304
    %vm311 = vmor %vm309, %vm310
    %v312 = vsel %vm311, %v304, %v308
    %v313 = vand.u32 2147483647, %v303
    %vm314 = vcmp.eq.f32.partialorder %v313, 8.507059e+37
    %v315 = vand.u32 %v303, 2147483648
    %v316 = vor.u32 1.1754944e-38, %v315
    %v317 = vsel %vm314, %v316, %v312
    %v318 = vmul.f32 1.0, %v317
    %v319 = vtanh.pop %v299
    %v320 = vmul.f32 %v318, %v272
    %322 = vrot.lane.b32.xlu0 %v319, 64
    %v323 = vpop.permute.xlu0 %322
    %v325 = vmul.f32 %v318, %v323
    %327 = vrot.lane.b32.xlu0 %v325, 32
    %v328 = vpop.permute.xlu0 %327
    %v330 = vadd.f32 %v320, %v328
    %v331 = vtanh.pop %v330
    %333 = vrot.lane.b32.xlu0 %v331, 64
    %v334 = vpop.permute.xlu0 %333
    %v336 = vmul.f32 %v318, %v334
    %s337 = sadd.s32 %s119, 2
    %v338 = vstv %s337
    %vm339 = vcmp.gt.s32.totalorder %v114, %v338
    %v340 = vsel %vm339, 1, 0
    %341 = vset.pattern.permute.xlu0 0
    %342 = vperm.xlu0 %341, %v340
    %v343 = vpop.permute.xlu0 %342
    %vm344 = vcmp.eq.s32.totalorder %v343, 1
    %v345 = vsel %vm344, %v336, %v271
    %v346 = vsel %vm344, %v330, %v272
    %v347 = vsel %vm344, %v336, 0.0
    %349 = vrot.lane.b32.xlu0 %v345, 32
    %v350 = vpop.permute.xlu0 %349
    %v351 = vsel %vm48, %v350, 0
    %353 = vmatpush.msra.mxu0 0.0
    %354 = vmatpush.msra.mxu0 0.0
    %355 = vmatpush.msra.mxu0 0.0
    %356 = vmatpush.msra.mxu0 0.0
    %357 = vmatpush.msra.mxu0 0.0
    %358 = vmatpush.msra.mxu0 0.0
    %359 = vmatpush.msra.mxu0 0.0
    %360 = vmatpush.msra.mxu0 0.0
    %361 = vmatpush.msra.mxu0 0.0
    %362 = vmatpush.msra.mxu0 0.0
    %363 = vmatpush.msra.mxu0 0.0
    %364 = vmatpush.msra.mxu0 0.0
    %365 = vmatpush.msra.mxu0 %v118
    %366 = vmatpush.msra.mxu0 %v117
    %367 = vmatpush.msra.mxu0 %v116
    %368 = vmatpush.msra.mxu0 %v115
    %369 = vmatmul.f32.gmra.mxu0 %v351
    %v370 = vpop.f32.mrf.mxu0
    %v371 = vadd.f32 0.0, %v370
    %372 = vdwg.mxu0
    %v373 = vadd.f32 %v100, %v371
    %v374 = vxor.u32 %v373, 2147483648
    %v375 = vmul.f32 %v374, 1.442695
    %v376 = vpow.pop %v375
    %v377 = vadd.f32 %v376, 1.0
    %v378 = vrcp.pop %v377
    %v379 = vmul.f32 %v377, %v378
    %v380 = vsub.f32 1.0, %v379
    %v381 = vmul.f32 %v378, %v380
    %v382 = vadd.f32 %v378, %v381
    %vm383 = vweird.f32 %v377
    %vm384 = vweird.f32 %v378
    %vm385 = vmor %vm383, %vm384
    %v386 = vsel %vm385, %v378, %v382
    %v387 = vand.u32 2147483647, %v377
    %vm388 = vcmp.eq.f32.partialorder %v387, 8.507059e+37
    %v389 = vand.u32 %v377, 2147483648
    %v390 = vor.u32 1.1754944e-38, %v389
    %v391 = vsel %vm388, %v390, %v386
    %v392 = vmul.f32 1.0, %v391
    %v393 = vtanh.pop %v373
    %v394 = vmul.f32 %v392, %v346
    %396 = vrot.lane.b32.xlu0 %v393, 64
    %v397 = vpop.permute.xlu0 %396
    %v399 = vmul.f32 %v392, %v397
    %401 = vrot.lane.b32.xlu0 %v399, 32
    %v402 = vpop.permute.xlu0 %401
    %v404 = vadd.f32 %v394, %v402
    %v405 = vtanh.pop %v404
    %407 = vrot.lane.b32.xlu0 %v405, 64
    %v408 = vpop.permute.xlu0 %407
    %v410 = vmul.f32 %v392, %v408
    %s411 = sadd.s32 %s119, 3
    %v412 = vstv %s411
    %vm413 = vcmp.gt.s32.totalorder %v114, %v412
    %v414 = vsel %vm413, 1, 0
    %415 = vset.pattern.permute.xlu0 0
    %416 = vperm.xlu0 %415, %v414
    %v417 = vpop.permute.xlu0 %416
    %vm418 = vcmp.eq.s32.totalorder %v417, 1
    %v419 = vsel %vm418, %v410, %v345
    %v420 = vsel %vm418, %v404, %v346
    %v421 = vsel %vm418, %v410, 0.0
    %423 = vrot.lane.b32.xlu0 %v419, 32
    %v424 = vpop.permute.xlu0 %423
    %v425 = vsel %vm48, %v424, 0
    %427 = vmatpush.msra.mxu0 0.0
    %428 = vmatpush.msra.mxu0 0.0
    %429 = vmatpush.msra.mxu0 0.0
    %430 = vmatpush.msra.mxu0 0.0
    %431 = vmatpush.msra.mxu0 0.0
    %432 = vmatpush.msra.mxu0 0.0
    %433 = vmatpush.msra.mxu0 0.0
    %434 = vmatpush.msra.mxu0 0.0
    %435 = vmatpush.msra.mxu0 0.0
    %436 = vmatpush.msra.mxu0 0.0
    %437 = vmatpush.msra.mxu0 0.0
    %438 = vmatpush.msra.mxu0 0.0
    %439 = vmatpush.msra.mxu0 %v118
    %440 = vmatpush.msra.mxu0 %v117
    %441 = vmatpush.msra.mxu0 %v116
    %442 = vmatpush.msra.mxu0 %v115
    %443 = vmatmul.f32.gmra.mxu0 %v425
    %v444 = vpop.f32.mrf.mxu0
    %v445 = vadd.f32 0.0, %v444
    %446 = vdwg.mxu0
    %v447 = vadd.f32 %v103, %v445
    %v448 = vxor.u32 %v447, 2147483648
    %v449 = vmul.f32 %v448, 1.442695
    %v450 = vpow.pop %v449
    %v451 = vadd.f32 %v450, 1.0
    %v452 = vrcp.pop %v451
    %v453 = vmul.f32 %v451, %v452
    %v454 = vsub.f32 1.0, %v453
    %v455 = vmul.f32 %v452, %v454
    %v456 = vadd.f32 %v452, %v455
    %vm457 = vweird.f32 %v451
    %vm458 = vweird.f32 %v452
    %vm459 = vmor %vm457, %vm458
    %v460 = vsel %vm459, %v452, %v456
    %v461 = vand.u32 2147483647, %v451
    %vm462 = vcmp.eq.f32.partialorder %v461, 8.507059e+37
    %v463 = vand.u32 %v451, 2147483648
    %v464 = vor.u32 1.1754944e-38, %v463
    %v465 = vsel %vm462, %v464, %v460
    %v466 = vmul.f32 1.0, %v465
    %v467 = vtanh.pop %v447
    %v468 = vmul.f32 %v466, %v420
    %470 = vrot.lane.b32.xlu0 %v467, 64
    %v471 = vpop.permute.xlu0 %470
    %v473 = vmul.f32 %v466, %v471
    %475 = vrot.lane.b32.xlu0 %v473, 32
    %v476 = vpop.permute.xlu0 %475
    %v478 = vadd.f32 %v468, %v476
    %v479 = vtanh.pop %v478
    %481 = vrot.lane.b32.xlu0 %v479, 64
    %v482 = vpop.permute.xlu0 %481
    %v484 = vmul.f32 %v466, %v482
    %s485 = sadd.s32 %s119, 4
    %v486 = vstv %s485
    %vm487 = vcmp.gt.s32.totalorder %v114, %v486
    %v488 = vsel %vm487, 1, 0
    %489 = vset.pattern.permute.xlu0 0
    %490 = vperm.xlu0 %489, %v488
    %v491 = vpop.permute.xlu0 %490
    %vm492 = vcmp.eq.s32.totalorder %v491, 1
    %v493 = vsel %vm492, %v484, %v419
    %v494 = vsel %vm492, %v478, %v420
    %v495 = vsel %vm492, %v484, 0.0
    %497 = vrot.lane.b32.xlu0 %v493, 32
    %v498 = vpop.permute.xlu0 %497
    %v499 = vsel %vm48, %v498, 0
    %501 = vmatpush.msra.mxu0 0.0
    %502 = vmatpush.msra.mxu0 0.0
    %503 = vmatpush.msra.mxu0 0.0
    %504 = vmatpush.msra.mxu0 0.0
    %505 = vmatpush.msra.mxu0 0.0
    %506 = vmatpush.msra.mxu0 0.0
    %507 = vmatpush.msra.mxu0 0.0
    %508 = vmatpush.msra.mxu0 0.0
    %509 = vmatpush.msra.mxu0 0.0
    %510 = vmatpush.msra.mxu0 0.0
    %511 = vmatpush.msra.mxu0 0.0
    %512 = vmatpush.msra.mxu0 0.0
    %513 = vmatpush.msra.mxu0 %v118
    %514 = vmatpush.msra.mxu0 %v117
    %515 = vmatpush.msra.mxu0 %v116
    %516 = vmatpush.msra.mxu0 %v115
    %517 = vmatmul.f32.gmra.mxu0 %v499
    %v518 = vpop.f32.mrf.mxu0
    %v519 = vadd.f32 0.0, %v518
    %520 = vdwg.mxu0
    %v521 = vadd.f32 %v106, %v519
    %v522 = vxor.u32 %v521, 2147483648
    %v523 = vmul.f32 %v522, 1.442695
    %v524 = vpow.pop %v523
    %v525 = vadd.f32 %v524, 1.0
    %v526 = vrcp.pop %v525
    %v527 = vmul.f32 %v525, %v526
    %v528 = vsub.f32 1.0, %v527
    %v529 = vmul.f32 %v526, %v528
    %v530 = vadd.f32 %v526, %v529
    %vm531 = vweird.f32 %v525
    %vm532 = vweird.f32 %v526
    %vm533 = vmor %vm531, %vm532
    %v534 = vsel %vm533, %v526, %v530
    %v535 = vand.u32 2147483647, %v525
    %vm536 = vcmp.eq.f32.partialorder %v535, 8.507059e+37
    %v537 = vand.u32 %v525, 2147483648
    %v538 = vor.u32 1.1754944e-38, %v537
    %v539 = vsel %vm536, %v538, %v534
    %v540 = vmul.f32 1.0, %v539
    %v541 = vtanh.pop %v521
    %v542 = vmul.f32 %v540, %v494
    %544 = vrot.lane.b32.xlu0 %v541, 64
    %v545 = vpop.permute.xlu0 %544
    %v547 = vmul.f32 %v540, %v545
    %549 = vrot.lane.b32.xlu0 %v547, 32
    %v550 = vpop.permute.xlu0 %549
    %v552 = vadd.f32 %v542, %v550
    %v553 = vtanh.pop %v552
    %555 = vrot.lane.b32.xlu0 %v553, 64
    %v556 = vpop.permute.xlu0 %555
    %v558 = vmul.f32 %v540, %v556
    %s559 = sadd.s32 %s119, 5
    %v560 = vstv %s559
    %vm561 = vcmp.gt.s32.totalorder %v114, %v560
    %v562 = vsel %vm561, 1, 0
    %563 = vset.pattern.permute.xlu0 0
    %564 = vperm.xlu0 %563, %v562
    %v565 = vpop.permute.xlu0 %564
    %vm566 = vcmp.eq.s32.totalorder %v565, 1
    %v567 = vsel %vm566, %v558, %v493
    %v568 = vsel %vm566, %v552, %v494
    %v569 = vsel %vm566, %v558, 0.0
    %571 = vrot.lane.b32.xlu0 %v567, 32
    %v572 = vpop.permute.xlu0 %571
    %v573 = vsel %vm48, %v572, 0
    %575 = vmatpush.msra.mxu0 0.0
    %576 = vmatpush.msra.mxu0 0.0
    %577 = vmatpush.msra.mxu0 0.0
    %578 = vmatpush.msra.mxu0 0.0
    %579 = vmatpush.msra.mxu0 0.0
    %580 = vmatpush.msra.mxu0 0.0
    %581 = vmatpush.msra.mxu0 0.0
    %582 = vmatpush.msra.mxu0 0.0
    %583 = vmatpush.msra.mxu0 0.0
    %584 = vmatpush.msra.mxu0 0.0
    %585 = vmatpush.msra.mxu0 0.0
    %586 = vmatpush.msra.mxu0 0.0
    %587 = vmatpush.msra.mxu0 %v118
    %588 = vmatpush.msra.mxu0 %v117
    %589 = vmatpush.msra.mxu0 %v116
    %590 = vmatpush.msra.mxu0 %v115
    %591 = vmatmul.f32.gmra.mxu0 %v573
    %v592 = vpop.f32.mrf.mxu0
    %v593 = vadd.f32 0.0, %v592
    %594 = vdwg.mxu0
    %v595 = vadd.f32 %v109, %v593
    %v596 = vxor.u32 %v595, 2147483648
    %v597 = vmul.f32 %v596, 1.442695
    %v598 = vpow.pop %v597
    %v599 = vadd.f32 %v598, 1.0
    %v600 = vrcp.pop %v599
    %v601 = vmul.f32 %v599, %v600
    %v602 = vsub.f32 1.0, %v601
    %v603 = vmul.f32 %v600, %v602
    %v604 = vadd.f32 %v600, %v603
    %vm605 = vweird.f32 %v599
    %vm606 = vweird.f32 %v600
    %vm607 = vmor %vm605, %vm606
    %v608 = vsel %vm607, %v600, %v604
    %v609 = vand.u32 2147483647, %v599
    %vm610 = vcmp.eq.f32.partialorder %v609, 8.507059e+37
    %v611 = vand.u32 %v599, 2147483648
    %v612 = vor.u32 1.1754944e-38, %v611
    %v613 = vsel %vm610, %v612, %v608
    %v614 = vmul.f32 1.0, %v613
    %v615 = vtanh.pop %v595
    %v616 = vmul.f32 %v614, %v568
    %618 = vrot.lane.b32.xlu0 %v615, 64
    %v619 = vpop.permute.xlu0 %618
    %v621 = vmul.f32 %v614, %v619
    %623 = vrot.lane.b32.xlu0 %v621, 32
    %v624 = vpop.permute.xlu0 %623
    %v626 = vadd.f32 %v616, %v624
    %v627 = vtanh.pop %v626
    %629 = vrot.lane.b32.xlu0 %v627, 64
    %v630 = vpop.permute.xlu0 %629
    %v632 = vmul.f32 %v614, %v630
    %s633 = sadd.s32 %s119, 6
    %v634 = vstv %s633
    %vm635 = vcmp.gt.s32.totalorder %v114, %v634
    %v636 = vsel %vm635, 1, 0
    %637 = vset.pattern.permute.xlu0 0
    %638 = vperm.xlu0 %637, %v636
    %v639 = vpop.permute.xlu0 %638
    %vm640 = vcmp.eq.s32.totalorder %v639, 1
    %v641 = vsel %vm640, %v632, %v567
    %v642 = vsel %vm640, %v626, %v568
    %v643 = vsel %vm640, %v632, 0.0
    %645 = vrot.lane.b32.xlu0 %v641, 32
    %v646 = vpop.permute.xlu0 %645
    %v647 = vsel %vm48, %v646, 0
    %649 = vmatpush.msra.mxu0 0.0
    %650 = vmatpush.msra.mxu0 0.0
    %651 = vmatpush.msra.mxu0 0.0
    %652 = vmatpush.msra.mxu0 0.0
    %653 = vmatpush.msra.mxu0 0.0
    %654 = vmatpush.msra.mxu0 0.0
    %655 = vmatpush.msra.mxu0 0.0
    %656 = vmatpush.msra.mxu0 0.0
    %657 = vmatpush.msra.mxu0 0.0
    %658 = vmatpush.msra.mxu0 0.0
    %659 = vmatpush.msra.mxu0 0.0
    %660 = vmatpush.msra.mxu0 0.0
    %661 = vmatpush.msra.mxu0 %v118
    %662 = vmatpush.msra.mxu0 %v117
    %663 = vmatpush.msra.mxu0 %v116
    %664 = vmatpush.msra.mxu0 %v115
    %665 = vmatmul.f32.gmra.mxu0 %v647
    %v666 = vpop.f32.mrf.mxu0
    %v667 = vadd.f32 0.0, %v666
    %668 = vdwg.mxu0
    %v669 = vadd.f32 %v112, %v667
    %v670 = vxor.u32 %v669, 2147483648
    %v671 = vmul.f32 %v670, 1.442695
    %v672 = vpow.pop %v671
    %v673 = vadd.f32 %v672, 1.0
    %v674 = vrcp.pop %v673
    %v675 = vmul.f32 %v673, %v674
    %v676 = vsub.f32 1.0, %v675
    %v677 = vmul.f32 %v674, %v676
    %v678 = vadd.f32 %v674, %v677
    %vm679 = vweird.f32 %v673
    %vm680 = vweird.f32 %v674
    %vm681 = vmor %vm679, %vm680
    %v682 = vsel %vm681, %v674, %v678
    %v683 = vand.u32 2147483647, %v673
    %vm684 = vcmp.eq.f32.partialorder %v683, 8.507059e+37
    %v685 = vand.u32 %v673, 2147483648
    %v686 = vor.u32 1.1754944e-38, %v685
    %v687 = vsel %vm684, %v686, %v682
    %v688 = vmul.f32 1.0, %v687
    %v689 = vtanh.pop %v669
    %v690 = vmul.f32 %v688, %v642
    %692 = vrot.lane.b32.xlu0 %v689, 64
    %v693 = vpop.permute.xlu0 %692
    %v695 = vmul.f32 %v688, %v693
    %697 = vrot.lane.b32.xlu0 %v695, 32
    %v698 = vpop.permute.xlu0 %697
    %v700 = vadd.f32 %v690, %v698
    %v701 = vtanh.pop %v700
    %703 = vrot.lane.b32.xlu0 %v701, 64
    %v704 = vpop.permute.xlu0 %703
    %v706 = vmul.f32 %v688, %v704
    %s707 = sadd.s32 %s119, 7
    %v708 = vstv %s707
    %vm709 = vcmp.gt.s32.totalorder %v114, %v708
    %v710 = vsel %vm709, 1, 0
    %711 = vset.pattern.permute.xlu0 0
    %712 = vperm.xlu0 %711, %v710
    %v713 = vpop.permute.xlu0 %712
    %vm714 = vcmp.eq.s32.totalorder %v713, 1
    %v715 = vsel %vm714, %v706, %v641
    %v716 = vsel %vm714, %v700, %v642
    %v717 = vsel %vm714, %v706, 0.0
    %719 = vrot.lane.b32.xlu0 %v715, 32
    %v720 = vpop.permute.xlu0 %719
    %722 = vst.msk [vmem:[#allocation2] sm:$0xff] %vm48, %v720
    %724 = vrot.lane.b32.xlu0 %v716, 96
    %v725 = vpop.permute.xlu0 %724
    %727 = vst.msk [vmem:[#allocation3] sm:$0xff] %vm48, %v725
    %729 = vrot.lane.b32.xlu0 %v199, 32
    %v730 = vpop.permute.xlu0 %729
    %733 = vrot.lane.b32.xlu0 %v273, 64
    %v734 = vpop.permute.xlu0 %733
    %737 = vrot.lane.b32.xlu0 %v347, 96
    %v738 = vpop.permute.xlu0 %737
    %741 = vrot.lane.b32.xlu0 %v495, 32
    %v742 = vpop.permute.xlu0 %741
    %745 = vrot.lane.b32.xlu0 %v569, 64
    %v746 = vpop.permute.xlu0 %745
    %749 = vrot.lane.b32.xlu0 %v643, 96
    %v750 = vpop.permute.xlu0 %749
    %v752 = vsel %vm48, %v730, %v734
    %vm753 = vcmask 523264
    %v754 = vsel %vm753, %v752, %v738
    %vm755 = vcmask 785408
    %v756 = vsel %vm755, %v754, %v421
    %v757 = vsel %vm48, %v742, %v746
    %v758 = vsel %vm753, %v757, %v750
    %v759 = vsel %vm755, %v758, %v717
    %760 = vst [vmem:[#allocation4] sm:$0xff] %v756
    %761 = vst [vmem:[#allocation4 + $0x8] sm:$0xff] %v759
    // Predicated region
    $region26: #{tpu_custom_call.1} parent=1 // pred_check
      %p762 = pneg %p25
    $region27: #{tpu_custom_call.1} parent=1 // pred_check_branch
      %764 = sbr.rel (%p762) target = $region29
    $region28: #{tpu_custom_call.1} parent=1 // pred_region
      %765 = vst.msk [vmem:[#allocation6] sm:$0xff] %vm48, %v720
      %766 = vst.msk [vmem:[#allocation8] sm:$0xff] %vm48, %v725
    $region29: #{tpu_custom_call.1} parent=1 // pred_fallthru
      _
    // Predicated region
    $region30: #{tpu_custom_call.1} parent=1 // pred_check
      _
    $region31: #{tpu_custom_call.1} parent=1 // pred_check_branch
      %768 = sbr.rel (0) target = $region33
    $region32: #{tpu_custom_call.1} parent=1 // pred_region
      %770 = vsyncadd [#allocation5], 0
      %s772 = sshll.u32 [#allocation4], 4
      %s773 = int_to_ptr.vmem [resolvable:$true] %s772
      %s774 = sshll.u32 %s5, 4
      %s775 = int_to_ptr.hbm [resolvable:$true] %s774
      %777 = dma.vmem_to_hbm [thread:$0]  %s773, 256, %s775, [#allocation5]
    $region33: #{tpu_custom_call.1} parent=1 // pred_fallthru
      _
    // Predicated region
    $region34: #{tpu_custom_call.1} parent=1 // pred_check
      _
    $region35: #{tpu_custom_call.1} parent=1 // pred_check_branch
      %779 = sbr.rel (0) target = $region37
    $region36: #{tpu_custom_call.1} parent=1 // pred_region
      %781 = vsyncadd [#allocation7], 0
      %s783 = sshll.u32 [#allocation6], 4
      %s784 = int_to_ptr.vmem [resolvable:$true] %s783
      %s785 = sshll.u32 %s6, 4
      %s786 = int_to_ptr.hbm [resolvable:$true] %s785
      %788 = dma.vmem_to_hbm [thread:$0]  %s784, 128, %s786, [#allocation7]
    $region37: #{tpu_custom_call.1} parent=1 // pred_fallthru
      _
    // Predicated region
    $region38: #{tpu_custom_call.1} parent=1 // pred_check
      _
    $region39: #{tpu_custom_call.1} parent=1 // pred_check_branch
      %790 = sbr.rel (0) target = $region41
    $region40: #{tpu_custom_call.1} parent=1 // pred_region
      %792 = vsyncadd [#allocation7], 0
      %s794 = sshll.u32 [#allocation8], 4
      %s795 = int_to_ptr.vmem [resolvable:$true] %s794
      %s796 = sshll.u32 %s7, 4
      %s797 = int_to_ptr.hbm [resolvable:$true] %s796
      %799 = dma.vmem_to_hbm [thread:$0]  %s795, 128, %s797, [#allocation7]
    $region41: #{tpu_custom_call.1} parent=1 // pred_fallthru
      _
    // Predicated region
    $region42: #{tpu_custom_call.1} parent=1 // pred_check
      _
    $region43: #{tpu_custom_call.1} parent=1 // pred_check_branch
      %801 = sbr.rel (0) target = $region45
    $region44: #{tpu_custom_call.1} parent=1 // pred_region
      %803 = dma.done [#allocation5], 256
    $region45: #{tpu_custom_call.1} parent=1 // pred_fallthru
      _
    // Predicated region
    $region46: #{tpu_custom_call.1} parent=1 // pred_check
      _
    $region47: #{tpu_custom_call.1} parent=1 // pred_check_branch
      %805 = sbr.rel (0) target = $region49
    $region48: #{tpu_custom_call.1} parent=1 // pred_region
      %807 = dma.done [#allocation7], 128
    $region49: #{tpu_custom_call.1} parent=1 // pred_fallthru
      _
    // Predicated region
    $region50: #{tpu_custom_call.1} parent=1 // pred_check
      _
    $region51: #{tpu_custom_call.1} parent=1 // pred_check_branch
      %809 = sbr.rel (0) target = $region53
    $region52: #{tpu_custom_call.1} parent=1 // pred_region
      %811 = dma.done [#allocation7], 128
    $region53: #{tpu_custom_call.1} parent=1 // pred_fallthru
      _
    %812 = vsyncpa [#allocation5], 1
    %813 = vsyncpa [#allocation7], 1

</llo_original>
